<compile_context>
chip_gen: v7x
topology: tpu7x:2x2x1
jax: 0.10.0
libtpu: 0.0.40
codegen_flags: <defaults>
</compile_context>

<pallas_src>
import math

import jax
import jax.numpy as jnp
from jax.experimental import pallas as pl
from jax.experimental.pallas import tpu as pltpu


def _round_up(v: int, m: int) -> int:
    return -(-v // m) * m


def _make_kernel(num_logits: int, eps: float):
    def kernel(x_ref, w_ref, b_ref, logbinom_ref, logits_ref, aux_ref):
        x = x_ref[...]                                        # (T, F) f32
        t = x.shape[0]

        # --- fused F->{param, tau} contraction on the (otherwise idle) MXU ----
        # w_ref is (F, 8): column 0 = param-head weight, column 1 = tau-head
        # weight, columns 2..7 zero padding.  HIGHEST keeps full f32 accuracy to
        # match the nn.Linear math (MXU is idle anyway).
        z = jnp.dot(x, w_ref[...],
                    preferred_element_type=jnp.float32,
                    precision=jax.lax.Precision.HIGHEST) + b_ref[...]   # (T, 8)
        zp = z[:, 0:1]                                        # (T, 1) param pre-act
        zt = z[:, 1:2]                                        # (T, 1) tau pre-act

        # --- numerically-stable sigmoid (no inf intermediates) ----------------
        e = jnp.exp(-jnp.abs(zp))
        param = jnp.where(zp >= 0.0, 1.0 / (1.0 + e), e / (1.0 + e))

        # --- numerically-stable softplus; tau = 1 / (1 + softplus) ------------
        sp = jnp.maximum(zt, 0.0) + jnp.log(1.0 + jnp.exp(-jnp.abs(zt)))
        one_plus_sp = 1.0 + sp                                # == 1 / tau
        tau = 1.0 / one_plus_sp                               # per-row only

        # --- binomial PMF log-probabilities, factored form ---------------------
        #   log_f = log_binom + k*d + c
        #   d = log(p+eps) - log(1-p+eps),  c = (L-1)*log(1-p+eps)   (per row)
        # -> only ONE (T, L) multiply; logs are per-row EUP work.  The logits
        # index is a free in-kernel iota (no constant input stream for it).
        log_p = jnp.log(param + eps)                          # (T, 1)
        log_q = jnp.log(1.0 - param + eps)                    # (T, 1)
        d = log_p - log_q
        c = float(num_logits - 1) * log_q
        k = jax.lax.broadcasted_iota(jnp.int32, (t, num_logits), 1).astype(jnp.float32)
        log_f = logbinom_ref[...] + k * d + c                 # (T, L)

        # logits = log_f / tau  ==  log_f * (1 + softplus)  -> no (T, L) divide.
        logits_ref[...] = log_f * one_plus_sp

        # --- merged (T, 2) aux output: col 0 = param, col 1 = tau --------------
        # Single store / single output stream instead of two width-1 streams.
        col = jax.lax.broadcasted_iota(jnp.int32, (t, 2), 1)
        aux_ref[...] = jnp.where(col == 0, param, tau)

    return kernel


def _vmem_plan():
    """Return (scoped vmem limit for Mosaic, byte budget for tile sizing)."""
    phys = None
    try:
        phys = getattr(pltpu.get_tpu_info(), "vmem_capacity_bytes", None)
    except Exception:
        phys = None
    if not phys or phys <= 0:
        phys = 64 << 20                       # conservative fallback: v7x per-TC VMEM
    limit = int(min(phys * 3 // 4, 112 << 20))   # ~96 MiB on v5e/v6e, ~48 MiB on v7x
    budget = limit * 3 // 4                      # headroom for compiler-internal scratch
    return limit, budget


def _pick_tile_n(n: int, f: int, num_logits: int, budget_bytes: int) -> int:
    """Largest multiple-of-8 row tile whose lane-padded, double-buffered working
    set fits the VMEM budget, capped so large batches still get >=4 grid steps."""
    f_pad = _round_up(f, 128)
    l_pad = _round_up(num_logits, 128)
    # Pipelined streams (double-buffered): x (T,F), logits (T,L), aux (T,2 -> 128 lanes).
    per_row = 4 * (f_pad + l_pad + 128) * 2
    # Resident constants (w, b, log_binom) are also double-buffered by the pipeline.
    const_bytes = 2 * 4 * (_round_up(f, 8) * 128 + 8 * 128 + 8 * l_pad)
    avail = max(budget_bytes - const_bytes, 1 << 20)
    cap = min(max((avail // per_row) // 8 * 8, 8), 8192)
    # Once the batch is big enough to amortize the ~0.35us per-step overhead, keep
    # >=4 grid steps so the v7x megacore has work for both TensorCores and the
    # double-buffered pipeline actually overlaps DMA with compute.
    four_way = max(256, _round_up(-(-n // 4), 8))
    return int(min(cap, four_way, _round_up(n, 8)))


def unimodal_logits_head(x, wp, bp, wt, bt, *, num_logits: int, eps: float = 1e-6):
    """x: (N, F) f32. wp/wt: (1, F). bp/bt: (1, 1). Returns (logits, param, tau)."""
    x = x.astype(jnp.float32)
    n, f = x.shape
    L = num_logits

    # --- constants hoisted out of the kernel (computed once, on host) ---------
    # log C(L-1, k) via lgamma: robust even when the raw binomial coefficient
    # would overflow float32 (large L).
    log_binom = jnp.array(
        [math.lgamma(L) - math.lgamma(k + 1) - math.lgamma(L - k) for k in range(L)],
        dtype=jnp.float32).reshape(1, L)

    # Stack + zero-pad the two F->1 heads into one (F, 8) MXU operand.
    w_stack = jnp.zeros((f, 8), jnp.float32)
    w_stack = w_stack.at[:, 0].set(wp.reshape(f).astype(jnp.float32))
    w_stack = w_stack.at[:, 1].set(wt.reshape(f).astype(jnp.float32))
    b_stack = jnp.zeros((1, 8), jnp.float32)
    b_stack = b_stack.at[0, 0].set(bp.reshape(()).astype(jnp.float32))
    b_stack = b_stack.at[0, 1].set(bt.reshape(()).astype(jnp.float32))

    # --- batch tiling + pipelined launch (no padding, no output slicing) -------
    vmem_limit, vmem_budget = _vmem_plan()
    tile_n = _pick_tile_n(n, f, L, vmem_budget)
    grid = (pl.cdiv(n, tile_n),)          # ragged tail block handled by Pallas

    kernel = _make_kernel(L, eps)
    row_spec = lambda width: pl.BlockSpec((tile_n, width), lambda i: (i, 0))
    const_spec = lambda shape: pl.BlockSpec(shape, lambda i: (0, 0))

    logits, aux = pl.pallas_call(
        kernel,
        out_shape=(
            jax.ShapeDtypeStruct((n, L), jnp.float32),
            jax.ShapeDtypeStruct((n, 2), jnp.float32),   # [:, 0]=param, [:, 1]=tau
        ),
        grid=grid,
        in_specs=[
            row_spec(f),                 # x tile, pipelined over the batch axis
            const_spec((f, 8)),          # stacked head weights (resident every step)
            const_spec((1, 8)),          # stacked biases
            const_spec((1, L)),          # log binomial coefficients
        ],
        out_specs=(
            row_spec(L),
            row_spec(2),
        ),
        compiler_params=pltpu.CompilerParams(
            dimension_semantics=("parallel",),      # megacore-shard row tiles on v7x
            vmem_limit_bytes=vmem_limit,            # per-generation scoped limit
        ),
    )(x, w_stack, b_stack, log_binom)

    param = aux[:, 0:1]                  # tiny (N,1) slices; no full-output copies
    tau = aux[:, 1:2]
    return logits, param, tau


def _reference(x, wp, bp, wt, bt, num_logits, eps=1e-6):
    """Pure-JAX reference mirroring the PyTorch forward."""
    param = jax.nn.sigmoid(x @ wp.T + bp)                       # (N, 1)
    idx = jnp.arange(num_logits, dtype=jnp.float32)
    binom = jnp.array([math.comb(num_logits - 1, k) for k in range(num_logits)],
                      dtype=jnp.float32)
    log_f = (jnp.log(binom)
             + idx * jnp.log(param + eps)
             + (num_logits - 1 - idx) * jnp.log(1.0 - param + eps))
    tau = 1.0 / (1.0 + jax.nn.softplus(x @ wt.T + bt))
    return log_f / tau, param, tau


if __name__ == "__main__":
    F, L = 32, 8
    key = jax.random.PRNGKey(0)
    kx, kwp, kbp, kwt, kbt, kx2 = jax.random.split(key, 6)

    # nn.Linear-style init: U(-1/sqrt(F), 1/sqrt(F)).
    bound = 1.0 / math.sqrt(F)
    wp = jax.random.uniform(kwp, (1, F), jnp.float32, -bound, bound)
    bp = jax.random.uniform(kbp, (1, 1), jnp.float32, -bound, bound)
    wt = jax.random.uniform(kwt, (1, F), jnp.float32, -bound, bound)
    bt = jax.random.uniform(kbt, (1, 1), jnp.float32, -bound, bound)

    ok = True
    for n, kk in ((8, kx), (13, kx2)):   # 13 exercises the ragged-tail block path
        x = jax.random.normal(kk, (n, F), dtype=jnp.float32)
        logits, param, tau = unimodal_logits_head(x, wp, bp, wt, bt, num_logits=L)
        jax.block_until_ready((logits, param, tau))

        ref_logits, ref_param, ref_tau = _reference(x, wp, bp, wt, bt, L)
        ok &= logits.shape == (n, L) and param.shape == (n, 1) and tau.shape == (n, 1)
        ok &= bool(jnp.allclose(logits, ref_logits, rtol=1e-5, atol=1e-5))
        ok &= bool(jnp.allclose(param, ref_param, rtol=1e-5, atol=1e-5))
        ok &= bool(jnp.allclose(tau, ref_tau, rtol=1e-5, atol=1e-5))

    assert ok
    print("KERNEL_OK")
</pallas_src>

<mosaic_0001>
module attributes {stable_mosaic.version = 11 : i64} {
  func.func @kernel(%arg0: i32, %arg1: memref<8x32xf32, #tpu.memory_space<vmem>>, %arg2: memref<32x8xf32, #tpu.memory_space<vmem>>, %arg3: memref<1x8xf32, #tpu.memory_space<vmem>>, %arg4: memref<1x8xf32, #tpu.memory_space<vmem>>, %arg5: memref<8x8xf32, #tpu.memory_space<vmem>>, %arg6: memref<8x2xf32, #tpu.memory_space<vmem>>) attributes {dimension_semantics = [#tpu.dimension_semantics<parallel>], iteration_bounds = array<i64: 1>, scalar_prefetch = 0 : i64, scratch_operands = 0 : i64, tpu.core_type = #tpu.core_type<tc>, window_params = [{transform_indices = @transform_0, window_bounds = array<i64: 8, 32>}, {pipeline_mode = #tpu.pipeline_mode<synchronous>, transform_indices = @transform_1, window_bounds = array<i64: 32, 8>}, {pipeline_mode = #tpu.pipeline_mode<synchronous>, transform_indices = @transform_2, window_bounds = array<i64: 1, 8>}, {pipeline_mode = #tpu.pipeline_mode<synchronous>, transform_indices = @transform_3, window_bounds = array<i64: 1, 8>}, {transform_indices = @transform_4, window_bounds = array<i64: 8, 8>}, {transform_indices = @transform_5, window_bounds = array<i64: 8, 2>}]} {
    %c0 = arith.constant 0 : index
    %c0_0 = arith.constant 0 : index
    %0 = vector.load %arg1[%c0, %c0_0] : memref<8x32xf32, #tpu.memory_space<vmem>>, vector<8x32xf32>
    %c0_1 = arith.constant 0 : index
    %c0_2 = arith.constant 0 : index
    %1 = vector.load %arg2[%c0_1, %c0_2] : memref<32x8xf32, #tpu.memory_space<vmem>>, vector<32x8xf32>
    %cst = arith.constant dense<0.000000e+00> : vector<8x8xf32>
    %2 = tpu.matmul %0, %1, %cst {dimension_numbers = #tpu.dot_dimension_numbers<[1], [0], [0], [1], [0, 0, 1, 1], [], []>, precision = #tpu.contract_precision<fp32>} : vector<8x32xf32>, vector<32x8xf32>, vector<8x8xf32> -> vector<8x8xf32>
    %c0_3 = arith.constant 0 : index
    %c0_4 = arith.constant 0 : index
    %3 = vector.load %arg3[%c0_3, %c0_4] : memref<1x8xf32, #tpu.memory_space<vmem>>, vector<1x8xf32>
    %4 = vector.broadcast %3 : vector<1x8xf32> to vector<8x8xf32>
    %5 = arith.addf %2, %4 : vector<8x8xf32>
    %6 = vector.extract_strided_slice %5 {offsets = [0, 0], sizes = [8, 1], strides = [1, 1]} : vector<8x8xf32> to vector<8x1xf32>
    %7 = vector.extract_strided_slice %5 {offsets = [0, 1], sizes = [8, 1], strides = [1, 1]} : vector<8x8xf32> to vector<8x1xf32>
    %8 = math.absf %6 : vector<8x1xf32>
    %cst_5 = arith.constant 0.000000e+00 : f32
    %9 = vector.broadcast %cst_5 : f32 to vector<8x1xf32>
    %10 = arith.subf %9, %8 : vector<8x1xf32>
    %11 = math.exp %10 : vector<8x1xf32>
    %cst_6 = arith.constant 0.000000e+00 : f32
    %12 = vector.broadcast %cst_6 : f32 to vector<8x1xf32>
    %13 = arith.cmpf oge, %6, %12 : vector<8x1xf32>
    %cst_7 = arith.constant 1.000000e+00 : f32
    %14 = vector.broadcast %cst_7 : f32 to vector<8x1xf32>
    %15 = arith.addf %14, %11 : vector<8x1xf32>
    %cst_8 = arith.constant 1.000000e+00 : f32
    %16 = vector.broadcast %cst_8 : f32 to vector<8x1xf32>
    %17 = arith.divf %16, %15 : vector<8x1xf32>
    %cst_9 = arith.constant 1.000000e+00 : f32
    %18 = vector.broadcast %cst_9 : f32 to vector<8x1xf32>
    %19 = arith.addf %18, %11 : vector<8x1xf32>
    %20 = arith.divf %11, %19 : vector<8x1xf32>
    %21 = arith.select %13, %17, %20 : vector<8x1xi1>, vector<8x1xf32>
    %cst_10 = arith.constant 0.000000e+00 : f32
    %22 = vector.broadcast %cst_10 : f32 to vector<8x1xf32>
    %23 = arith.maximumf %7, %22 : vector<8x1xf32>
    %24 = math.absf %7 : vector<8x1xf32>
    %cst_11 = arith.constant 0.000000e+00 : f32
    %25 = vector.broadcast %cst_11 : f32 to vector<8x1xf32>
    %26 = arith.subf %25, %24 : vector<8x1xf32>
    %27 = math.exp %26 : vector<8x1xf32>
    %cst_12 = arith.constant 1.000000e+00 : f32
    %28 = vector.broadcast %cst_12 : f32 to vector<8x1xf32>
    %29 = arith.addf %28, %27 : vector<8x1xf32>
    %30 = math.log %29 : vector<8x1xf32>
    %31 = arith.addf %23, %30 : vector<8x1xf32>
    %cst_13 = arith.constant 1.000000e+00 : f32
    %32 = vector.broadcast %cst_13 : f32 to vector<8x1xf32>
    %33 = arith.addf %32, %31 : vector<8x1xf32>
    %cst_14 = arith.constant 1.000000e+00 : f32
    %34 = vector.broadcast %cst_14 : f32 to vector<8x1xf32>
    %35 = arith.divf %34, %33 : vector<8x1xf32>
    %cst_15 = arith.constant 9.99999997E-7 : f32
    %36 = vector.broadcast %cst_15 : f32 to vector<8x1xf32>
    %37 = arith.addf %21, %36 : vector<8x1xf32>
    %38 = math.log %37 : vector<8x1xf32>
    %cst_16 = arith.constant 1.000000e+00 : f32
    %39 = vector.broadcast %cst_16 : f32 to vector<8x1xf32>
    %40 = arith.subf %39, %21 : vector<8x1xf32>
    %cst_17 = arith.constant 9.99999997E-7 : f32
    %41 = vector.broadcast %cst_17 : f32 to vector<8x1xf32>
    %42 = arith.addf %40, %41 : vector<8x1xf32>
    %43 = math.log %42 : vector<8x1xf32>
    %44 = arith.subf %38, %43 : vector<8x1xf32>
    %cst_18 = arith.constant 7.000000e+00 : f32
    %45 = vector.broadcast %cst_18 : f32 to vector<8x1xf32>
    %46 = arith.mulf %45, %43 : vector<8x1xf32>
    %47 = tpu.iota {dimensions = array<i32: 1>} : vector<8x8xi32>
    %48 = arith.sitofp %47 : vector<8x8xi32> to vector<8x8xf32>
    %c0_19 = arith.constant 0 : index
    %c0_20 = arith.constant 0 : index
    %49 = vector.load %arg4[%c0_19, %c0_20] : memref<1x8xf32, #tpu.memory_space<vmem>>, vector<1x8xf32>
    %50 = vector.broadcast %44 : vector<8x1xf32> to vector<8x8xf32>
    %51 = arith.mulf %48, %50 : vector<8x8xf32>
    %52 = vector.broadcast %49 : vector<1x8xf32> to vector<8x8xf32>
    %53 = arith.addf %52, %51 : vector<8x8xf32>
    %54 = vector.broadcast %46 : vector<8x1xf32> to vector<8x8xf32>
    %55 = arith.addf %53, %54 : vector<8x8xf32>
    %56 = vector.broadcast %33 : vector<8x1xf32> to vector<8x8xf32>
    %57 = arith.mulf %55, %56 : vector<8x8xf32>
    %c0_21 = arith.constant 0 : index
    %c0_22 = arith.constant 0 : index
    %58 = vector.load %arg5[%c0_21, %c0_22] : memref<8x8xf32, #tpu.memory_space<vmem>>, vector<8x8xf32>
    tpu.vector_store %arg5[%c0_21, %c0_22], %57 {strides = array<i32>} : memref<8x8xf32, #tpu.memory_space<vmem>>, vector<8x8xf32>,
    %59 = tpu.iota {dimensions = array<i32: 1>} : vector<8x2xi32>
    %c0_i32 = arith.constant 0 : i32
    %60 = vector.broadcast %c0_i32 : i32 to vector<8x2xi32>
    %61 = arith.cmpi eq, %59, %60 : vector<8x2xi32>
    %62 = vector.shape_cast %21 : vector<8x1xf32> to vector<8x1xf32>
    %63 = vector.broadcast %62 : vector<8x1xf32> to vector<8x2xf32>
    %64 = vector.shape_cast %35 : vector<8x1xf32> to vector<8x1xf32>
    %65 = vector.broadcast %64 : vector<8x1xf32> to vector<8x2xf32>
    %66 = arith.select %61, %63, %65 : vector<8x2xi1>, vector<8x2xf32>
    %c0_23 = arith.constant 0 : index
    %c0_24 = arith.constant 0 : index
    %67 = vector.load %arg6[%c0_23, %c0_24] : memref<8x2xf32, #tpu.memory_space<vmem>>, vector<8x2xf32>
    tpu.vector_store %arg6[%c0_23, %c0_24], %66 {strides = array<i32>} : memref<8x2xf32, #tpu.memory_space<vmem>>, vector<8x2xf32>,
    return
  }
  func.func @transform_0(%arg0: i32) -> (i32, i32) {
    %c0_i32 = arith.constant 0 : i32
    %c0_i32_0 = arith.constant 0 : i32
    return %arg0, %c0_i32 : i32, i32
  }
  func.func @transform_1(%arg0: i32) -> (i32, i32) {
    %c0_i32 = arith.constant 0 : i32
    %c0_i32_0 = arith.constant 0 : i32
    %c0_i32_1 = arith.constant 0 : i32
    return %c0_i32, %c0_i32_0 : i32, i32
  }
  func.func @transform_2(%arg0: i32) -> (i32, i32) {
    %c0_i32 = arith.constant 0 : i32
    %c0_i32_0 = arith.constant 0 : i32
    %c0_i32_1 = arith.constant 0 : i32
    return %c0_i32, %c0_i32_0 : i32, i32
  }
  func.func @transform_3(%arg0: i32) -> (i32, i32) {
    %c0_i32 = arith.constant 0 : i32
    %c0_i32_0 = arith.constant 0 : i32
    %c0_i32_1 = arith.constant 0 : i32
    return %c0_i32, %c0_i32_0 : i32, i32
  }
  func.func @transform_4(%arg0: i32) -> (i32, i32) {
    %c0_i32 = arith.constant 0 : i32
    %c0_i32_0 = arith.constant 0 : i32
    return %arg0, %c0_i32 : i32, i32
  }
  func.func @transform_5(%arg0: i32) -> (i32, i32) {
    %c0_i32 = arith.constant 0 : i32
    %c0_i32_0 = arith.constant 0 : i32
    return %arg0, %c0_i32 : i32, i32
  }
}

</mosaic_0001>

<llo_original>
// kernel: tpu_custom_call.1
$region0: #{tpu_custom_call.1}
  #allocation0 [shape = 'u32[]', space=smem, size = 0x4, offset = 0x4, fixed_abs, tag = 'smem constant byte address 0x4 - core index']
  #allocation1 [shape = 'u32[144,128]{1,0:T(1,128)}', space=vmem, size = 0x12000, scoped, tag = 'internal scratch']
  %s0 = inlined_call_operand.vmem [shape: f32[8,32], index: 0, kind: input, shape index: {}]
  %s1 = inlined_call_operand.vmem [shape: f32[32,8], index: 1, kind: input, shape index: {}]
  %s2 = inlined_call_operand.vmem [shape: f32[1,8], index: 2, kind: input, shape index: {}]
  %s3 = inlined_call_operand.vmem [shape: f32[1,8], index: 3, kind: input, shape index: {}]
  %s4 = inlined_call_operand.hbm [shape: f32[8,8], index: 4, kind: output, shape index: {0}]
  %s5 = inlined_call_operand.vmem [shape: f32[8,2], index: 5, kind: output, shape index: {1}]
  %6 = xla_tuple %s4, %s5
  %s7 = sld [smem:[#allocation0]]
  $region34: #{tpu_custom_call.1} parent=0
    _
  %s9 = ssub.s32 1, %s7
  %s10 = scalar_select 0, %s9, %s7
  $region1: #{tpu_custom_call.1} parent=0
    #allocation2 [shape = 'u8[4096]{0}', space=vmem, size = 0x1000, scoped, tag = 'output window, operand 0, single buffered']
    #allocation3 [shape = 's32[1]{0}', space=sflag, size = 0x4, scoped, tag = 'scoped memory for tpu_custom_call.1']
    %11 = vsyncpa [#allocation3], 0
    // Predicated region
    $region2: #{tpu_custom_call.1} parent=1 // pred_check
      _
    $region3: #{tpu_custom_call.1} parent=1 // pred_check_branch
      %13 = sbr.rel (0) target = $region5
    $region4: #{tpu_custom_call.1} parent=1 // pred_region
      _
    $region5: #{tpu_custom_call.1} parent=1 // pred_fallthru
      _
    // Predicated region
    $region6: #{tpu_custom_call.1} parent=1 // pred_check
      _
    $region7: #{tpu_custom_call.1} parent=1 // pred_check_branch
      %15 = sbr.rel (0) target = $region9
    $region8: #{tpu_custom_call.1} parent=1 // pred_region
      _
    $region9: #{tpu_custom_call.1} parent=1 // pred_fallthru
      _
    // Predicated region
    $region10: #{tpu_custom_call.1} parent=1 // pred_check
      _
    $region11: #{tpu_custom_call.1} parent=1 // pred_check_branch
      %17 = sbr.rel (0) target = $region13
    $region12: #{tpu_custom_call.1} parent=1 // pred_region
      _
    $region13: #{tpu_custom_call.1} parent=1 // pred_fallthru
      _
    // Predicated region
    $region14: #{tpu_custom_call.1} parent=1 // pred_check
      _
    $region15: #{tpu_custom_call.1} parent=1 // pred_check_branch
      %19 = sbr.rel (0) target = $region17
    $region16: #{tpu_custom_call.1} parent=1 // pred_region
      _
    $region17: #{tpu_custom_call.1} parent=1 // pred_fallthru
      _
    %v20 = vld [vmem:[%s0] sm:$0xff]
    %v21 = vld [vmem:[%s1] sm:$0xff]
    %v22 = vld [vmem:[%s1 + $0x8] sm:$0xff]
    %v23 = vld [vmem:[%s1 + $0x10] sm:$0xff]
    %v24 = vld [vmem:[%s1 + $0x18] sm:$0xff]
    %v25 = vld [vmem:[%s2] sm:$0x1]
    %v27 = vlaneseq
    %v28 = vshrl.u32 %v27, 7
    %v29 = vsub.s32 0, %v28
    %v30 = vrot.slane %v25, %v29
    %vm32 = vcmask 261120
    %v34 = vsel %vm32, %v20, 0
    %36 = vmatprep.subr.mxu0 0.0
    %v37 = vand.u32 %v21, 4294901760
    %38 = vmatpush1.msra.mxu0 %v37
    %39 = vmatprep.subr.mxu0 0.0
    %v40 = vand.u32 %v22, 4294901760
    %41 = vmatpush1.msra.mxu0 %v40
    %42 = vmatprep.subr.mxu0 0.0
    %v43 = vand.u32 %v23, 4294901760
    %44 = vmatpush1.msra.mxu0 %v43
    %45 = vmatprep.subr.mxu0 0.0
    %v46 = vand.u32 %v24, 4294901760
    %47 = vmatpush1.msra.mxu0 %v46
    %48 = vmatprep.subr.mxu0 0.0
    %49 = vmatpush1.msra.mxu0 0.0
    %50 = vmatprep.subr.mxu0 0.0
    %51 = vmatpush1.msra.mxu0 0.0
    %52 = vmatprep.subr.mxu0 0.0
    %53 = vmatpush1.msra.mxu0 0.0
    %54 = vmatprep.subr.mxu0 0.0
    %55 = vmatpush1.msra.mxu0 0.0
    %56 = vmatprep.subr.mxu0 0.0
    %57 = vmatpush1.msra.mxu0 0.0
    %58 = vmatprep.subr.mxu0 0.0
    %59 = vmatpush1.msra.mxu0 0.0
    %60 = vmatprep.subr.mxu0 0.0
    %61 = vmatpush1.msra.mxu0 0.0
    %62 = vmatprep.subr.mxu0 0.0
    %63 = vmatpush1.msra.mxu0 0.0
    %64 = vmatprep.subr.mxu0 0.0
    %65 = vmatpush1.msra.mxu0 0.0
    %66 = vmatprep.subr.mxu0 0.0
    %67 = vmatpush1.msra.mxu0 0.0
    %68 = vmatprep.subr.mxu0 0.0
    %69 = vmatpush1.msra.mxu0 0.0
    %70 = vmatprep.subr.mxu0 0.0
    %71 = vmatpush1.msra.mxu0 0.0
    %72 = vmatprep.subr.mxu0 0.0
    %73 = vmatpush1.msra.mxu0 0.0
    %74 = vmatprep.subr.mxu0 0.0
    %75 = vmatpush1.msra.mxu0 0.0
    %76 = vmatprep.subr.mxu0 0.0
    %77 = vmatpush1.msra.mxu0 0.0
    %78 = vmatprep.subr.mxu0 0.0
    %79 = vmatpush1.msra.mxu0 0.0
    %80 = vmatprep.subr.mxu0 0.0
    %81 = vmatpush1.msra.mxu0 0.0
    %82 = vmatprep.subr.mxu0 0.0
    %83 = vmatpush1.msra.mxu0 0.0
    %84 = vmatprep.subr.mxu0 0.0
    %85 = vmatpush1.msra.mxu0 0.0
    %86 = vmatprep.subr.mxu0 0.0
    %87 = vmatpush1.msra.mxu0 0.0
    %88 = vmatprep.subr.mxu0 0.0
    %89 = vmatpush1.msra.mxu0 0.0
    %90 = vmatprep.subr.mxu0 0.0
    %91 = vmatpush1.msra.mxu0 0.0
    %92 = vmatprep.subr.mxu0 0.0
    %93 = vmatpush1.msra.mxu0 0.0
    %94 = vmatprep.subr.mxu0 0.0
    %95 = vmatpush1.msra.mxu0 0.0
    %96 = vmatprep.subr.mxu0 0.0
    %97 = vmatpush1.msra.mxu0 0.0
    %98 = vmatprep.subr.mxu0 0.0
    %99 = vmatpush1.msra.mxu0 0.0
    %100 = vmatprep.subr.mxu0 0.0
    %101 = vmatpush1.msra.mxu0 0.0
    %102 = vmatprep.subr.mxu0 0.0
    %103 = vmatpush1.msra.mxu0 0.0
    %104 = vmatprep.mubr.f32.mxu0 0.0
    %v105 = vand.u32 %v34, 4294901760
    %v106 = vsub.f32 %v34, %v105
    %v107 = vand.u32 %v106, 4294901760
    %v108 = vsub.f32 %v106, %v107
    %v109 = vand.u32 %v108, 4294901760
    %110 = vmatmul.mubr.f32.gmra.mrb[0].mxu0 %v109
    %v111 = vpop.f32.mrb[0].mxu0
    %v112 = vadd.f32 %v30, %v111
    %v113 = vpop.f32.mrb[0].mxu0
    %114 = vdwg.mxu0
    %115 = vmatprep.subr.mxu0 0.0
    %v116 = vand.u32 %v21, 4294901760
    %v117 = vsub.f32 %v21, %v116
    %v118 = vand.u32 %v117, 4294901760
    %v119 = vsub.f32 %v117, %v118
    %v120 = vand.u32 %v119, 4294901760
    %121 = vmatpush1.msra.mxu0 %v120
    %122 = vmatprep.subr.mxu0 0.0
    %v123 = vand.u32 %v22, 4294901760
    %v124 = vsub.f32 %v22, %v123
    %v125 = vand.u32 %v124, 4294901760
    %v126 = vsub.f32 %v124, %v125
    %v127 = vand.u32 %v126, 4294901760
    %128 = vmatpush1.msra.mxu0 %v127
    %129 = vmatprep.subr.mxu0 0.0
    %v130 = vand.u32 %v23, 4294901760
    %v131 = vsub.f32 %v23, %v130
    %v132 = vand.u32 %v131, 4294901760
    %v133 = vsub.f32 %v131, %v132
    %v134 = vand.u32 %v133, 4294901760
    %135 = vmatpush1.msra.mxu0 %v134
    %136 = vmatprep.subr.mxu0 0.0
    %v137 = vand.u32 %v24, 4294901760
    %v138 = vsub.f32 %v24, %v137
    %v139 = vand.u32 %v138, 4294901760
    %v140 = vsub.f32 %v138, %v139
    %v141 = vand.u32 %v140, 4294901760
    %142 = vmatpush1.msra.mxu0 %v141
    %143 = vmatprep.subr.mxu0 0.0
    %144 = vmatpush1.msra.mxu0 0.0
    %145 = vmatprep.subr.mxu0 0.0
    %146 = vmatpush1.msra.mxu0 0.0
    %147 = vmatprep.subr.mxu0 0.0
    %148 = vmatpush1.msra.mxu0 0.0
    %149 = vmatprep.subr.mxu0 0.0
    %150 = vmatpush1.msra.mxu0 0.0
    %151 = vmatprep.subr.mxu0 0.0
    %152 = vmatpush1.msra.mxu0 0.0
    %153 = vmatprep.subr.mxu0 0.0
    %154 = vmatpush1.msra.mxu0 0.0
    %155 = vmatprep.subr.mxu0 0.0
    %156 = vmatpush1.msra.mxu0 0.0
    %157 = vmatprep.subr.mxu0 0.0
    %158 = vmatpush1.msra.mxu0 0.0
    %159 = vmatprep.subr.mxu0 0.0
    %160 = vmatpush1.msra.mxu0 0.0
    %161 = vmatprep.subr.mxu0 0.0
    %162 = vmatpush1.msra.mxu0 0.0
    %163 = vmatprep.subr.mxu0 0.0
    %164 = vmatpush1.msra.mxu0 0.0
    %165 = vmatprep.subr.mxu0 0.0
    %166 = vmatpush1.msra.mxu0 0.0
    %167 = vmatprep.subr.mxu0 0.0
    %168 = vmatpush1.msra.mxu0 0.0
    %169 = vmatprep.subr.mxu0 0.0
    %170 = vmatpush1.msra.mxu0 0.0
    %171 = vmatprep.subr.mxu0 0.0
    %172 = vmatpush1.msra.mxu0 0.0
    %173 = vmatprep.subr.mxu0 0.0
    %174 = vmatpush1.msra.mxu0 0.0
    %175 = vmatprep.subr.mxu0 0.0
    %176 = vmatpush1.msra.mxu0 0.0
    %177 = vmatprep.subr.mxu0 0.0
    %178 = vmatpush1.msra.mxu0 0.0
    %179 = vmatprep.subr.mxu0 0.0
    %180 = vmatpush1.msra.mxu0 0.0
    %181 = vmatprep.subr.mxu0 0.0
    %182 = vmatpush1.msra.mxu0 0.0
    %183 = vmatprep.subr.mxu0 0.0
    %184 = vmatpush1.msra.mxu0 0.0
    %185 = vmatprep.subr.mxu0 0.0
    %186 = vmatpush1.msra.mxu0 0.0
    %187 = vmatprep.subr.mxu0 0.0
    %188 = vmatpush1.msra.mxu0 0.0
    %189 = vmatprep.subr.mxu0 0.0
    %190 = vmatpush1.msra.mxu0 0.0
    %191 = vmatprep.subr.mxu0 0.0
    %192 = vmatpush1.msra.mxu0 0.0
    %193 = vmatprep.subr.mxu0 0.0
    %194 = vmatpush1.msra.mxu0 0.0
    %195 = vmatprep.subr.mxu0 0.0
    %196 = vmatpush1.msra.mxu0 0.0
    %197 = vmatprep.subr.mxu0 0.0
    %198 = vmatpush1.msra.mxu0 0.0
    %199 = vmatprep.mubr.f32.mxu0 0.0
    %v200 = vand.u32 %v34, 4294901760
    %201 = vmatmul.mubr.f32.gmra.mrb[0].mxu0 %v200
    %v202 = vpop.f32.mrb[0].mxu0
    %v203 = vadd.f32 %v112, %v202
    %v204 = vpop.f32.mrb[0].mxu0
    %205 = vdwg.mxu0
    %206 = vmatprep.subr.mxu0 0.0
    %v207 = vand.u32 %v21, 4294901760
    %v208 = vsub.f32 %v21, %v207
    %209 = vmatpush1.msra.mxu0 %v208
    %210 = vmatprep.subr.mxu0 0.0
    %v211 = vand.u32 %v22, 4294901760
    %v212 = vsub.f32 %v22, %v211
    %213 = vmatpush1.msra.mxu0 %v212
    %214 = vmatprep.subr.mxu0 0.0
    %v215 = vand.u32 %v23, 4294901760
    %v216 = vsub.f32 %v23, %v215
    %217 = vmatpush1.msra.mxu0 %v216
    %218 = vmatprep.subr.mxu0 0.0
    %v219 = vand.u32 %v24, 4294901760
    %v220 = vsub.f32 %v24, %v219
    %221 = vmatpush1.msra.mxu0 %v220
    %222 = vmatprep.subr.mxu0 0.0
    %223 = vmatpush1.msra.mxu0 0.0
    %224 = vmatprep.subr.mxu0 0.0
    %225 = vmatpush1.msra.mxu0 0.0
    %226 = vmatprep.subr.mxu0 0.0
    %227 = vmatpush1.msra.mxu0 0.0
    %228 = vmatprep.subr.mxu0 0.0
    %229 = vmatpush1.msra.mxu0 0.0
    %230 = vmatprep.subr.mxu0 0.0
    %231 = vmatpush1.msra.mxu0 0.0
    %232 = vmatprep.subr.mxu0 0.0
    %233 = vmatpush1.msra.mxu0 0.0
    %234 = vmatprep.subr.mxu0 0.0
    %235 = vmatpush1.msra.mxu0 0.0
    %236 = vmatprep.subr.mxu0 0.0
    %237 = vmatpush1.msra.mxu0 0.0
    %238 = vmatprep.subr.mxu0 0.0
    %239 = vmatpush1.msra.mxu0 0.0
    %240 = vmatprep.subr.mxu0 0.0
    %241 = vmatpush1.msra.mxu0 0.0
    %242 = vmatprep.subr.mxu0 0.0
    %243 = vmatpush1.msra.mxu0 0.0
    %244 = vmatprep.subr.mxu0 0.0
    %245 = vmatpush1.msra.mxu0 0.0
    %246 = vmatprep.subr.mxu0 0.0
    %247 = vmatpush1.msra.mxu0 0.0
    %248 = vmatprep.subr.mxu0 0.0
    %249 = vmatpush1.msra.mxu0 0.0
    %250 = vmatprep.subr.mxu0 0.0
    %251 = vmatpush1.msra.mxu0 0.0
    %252 = vmatprep.subr.mxu0 0.0
    %253 = vmatpush1.msra.mxu0 0.0
    %254 = vmatprep.subr.mxu0 0.0
    %255 = vmatpush1.msra.mxu0 0.0
    %256 = vmatprep.subr.mxu0 0.0
    %257 = vmatpush1.msra.mxu0 0.0
    %258 = vmatprep.subr.mxu0 0.0
    %259 = vmatpush1.msra.mxu0 0.0
    %260 = vmatprep.subr.mxu0 0.0
    %261 = vmatpush1.msra.mxu0 0.0
    %262 = vmatprep.subr.mxu0 0.0
    %263 = vmatpush1.msra.mxu0 0.0
    %264 = vmatprep.subr.mxu0 0.0
    %265 = vmatpush1.msra.mxu0 0.0
    %266 = vmatprep.subr.mxu0 0.0
    %267 = vmatpush1.msra.mxu0 0.0
    %268 = vmatprep.subr.mxu0 0.0
    %269 = vmatpush1.msra.mxu0 0.0
    %270 = vmatprep.subr.mxu0 0.0
    %271 = vmatpush1.msra.mxu0 0.0
    %272 = vmatprep.subr.mxu0 0.0
    %273 = vmatpush1.msra.mxu0 0.0
    %274 = vmatprep.subr.mxu0 0.0
    %275 = vmatpush1.msra.mxu0 0.0
    %276 = vmatprep.subr.mxu0 0.0
    %277 = vmatpush1.msra.mxu0 0.0
    %278 = vmatprep.mubr.f32.mxu0 0.0
    %v279 = vand.u32 %v34, 4294901760
    %v280 = vsub.f32 %v34, %v279
    %281 = vmatmul.mubr.f32.gmra.mrb[0].mxu0 %v280
    %v282 = vpop.f32.mrb[0].mxu0
    %v283 = vadd.f32 %v203, %v282
    %v284 = vpop.f32.mrb[0].mxu0
    %285 = vdwg.mxu0
    %286 = vmatprep.subr.mxu0 0.0
    %v287 = vand.u32 %v21, 4294901760
    %288 = vmatpush1.msra.mxu0 %v287
    %289 = vmatprep.subr.mxu0 0.0
    %v290 = vand.u32 %v22, 4294901760
    %291 = vmatpush1.msra.mxu0 %v290
    %292 = vmatprep.subr.mxu0 0.0
    %v293 = vand.u32 %v23, 4294901760
    %294 = vmatpush1.msra.mxu0 %v293
    %295 = vmatprep.subr.mxu0 0.0
    %v296 = vand.u32 %v24, 4294901760
    %297 = vmatpush1.msra.mxu0 %v296
    %298 = vmatprep.subr.mxu0 0.0
    %299 = vmatpush1.msra.mxu0 0.0
    %300 = vmatprep.subr.mxu0 0.0
    %301 = vmatpush1.msra.mxu0 0.0
    %302 = vmatprep.subr.mxu0 0.0
    %303 = vmatpush1.msra.mxu0 0.0
    %304 = vmatprep.subr.mxu0 0.0
    %305 = vmatpush1.msra.mxu0 0.0
    %306 = vmatprep.subr.mxu0 0.0
    %307 = vmatpush1.msra.mxu0 0.0
    %308 = vmatprep.subr.mxu0 0.0
    %309 = vmatpush1.msra.mxu0 0.0
    %310 = vmatprep.subr.mxu0 0.0
    %311 = vmatpush1.msra.mxu0 0.0
    %312 = vmatprep.subr.mxu0 0.0
    %313 = vmatpush1.msra.mxu0 0.0
    %314 = vmatprep.subr.mxu0 0.0
    %315 = vmatpush1.msra.mxu0 0.0
    %316 = vmatprep.subr.mxu0 0.0
    %317 = vmatpush1.msra.mxu0 0.0
    %318 = vmatprep.subr.mxu0 0.0
    %319 = vmatpush1.msra.mxu0 0.0
    %320 = vmatprep.subr.mxu0 0.0
    %321 = vmatpush1.msra.mxu0 0.0
    %322 = vmatprep.subr.mxu0 0.0
    %323 = vmatpush1.msra.mxu0 0.0
    %324 = vmatprep.subr.mxu0 0.0
    %325 = vmatpush1.msra.mxu0 0.0
    %326 = vmatprep.subr.mxu0 0.0
    %327 = vmatpush1.msra.mxu0 0.0
    %328 = vmatprep.subr.mxu0 0.0
    %329 = vmatpush1.msra.mxu0 0.0
    %330 = vmatprep.subr.mxu0 0.0
    %331 = vmatpush1.msra.mxu0 0.0
    %332 = vmatprep.subr.mxu0 0.0
    %333 = vmatpush1.msra.mxu0 0.0
    %334 = vmatprep.subr.mxu0 0.0
    %335 = vmatpush1.msra.mxu0 0.0
    %336 = vmatprep.subr.mxu0 0.0
    %337 = vmatpush1.msra.mxu0 0.0
    %338 = vmatprep.subr.mxu0 0.0
    %339 = vmatpush1.msra.mxu0 0.0
    %340 = vmatprep.subr.mxu0 0.0
    %341 = vmatpush1.msra.mxu0 0.0
    %342 = vmatprep.subr.mxu0 0.0
    %343 = vmatpush1.msra.mxu0 0.0
    %344 = vmatprep.subr.mxu0 0.0
    %345 = vmatpush1.msra.mxu0 0.0
    %346 = vmatprep.subr.mxu0 0.0
    %347 = vmatpush1.msra.mxu0 0.0
    %348 = vmatprep.subr.mxu0 0.0
    %349 = vmatpush1.msra.mxu0 0.0
    %350 = vmatprep.subr.mxu0 0.0
    %351 = vmatpush1.msra.mxu0 0.0
    %352 = vmatprep.subr.mxu0 0.0
    %353 = vmatpush1.msra.mxu0 0.0
    %354 = vmatprep.mubr.f32.mxu0 0.0
    %v355 = vand.u32 %v34, 4294901760
    %v356 = vsub.f32 %v34, %v355
    %v357 = vand.u32 %v356, 4294901760
    %358 = vmatmul.mubr.f32.gmra.mrb[0].mxu0 %v357
    %v359 = vpop.f32.mrb[0].mxu0
    %v360 = vadd.f32 %v283, %v359
    %v361 = vpop.f32.mrb[0].mxu0
    %362 = vdwg.mxu0
    %363 = vmatprep.subr.mxu0 0.0
    %v364 = vand.u32 %v21, 4294901760
    %v365 = vsub.f32 %v21, %v364
    %v366 = vand.u32 %v365, 4294901760
    %367 = vmatpush1.msra.mxu0 %v366
    %368 = vmatprep.subr.mxu0 0.0
    %v369 = vand.u32 %v22, 4294901760
    %v370 = vsub.f32 %v22, %v369
    %v371 = vand.u32 %v370, 4294901760
    %372 = vmatpush1.msra.mxu0 %v371
    %373 = vmatprep.subr.mxu0 0.0
    %v374 = vand.u32 %v23, 4294901760
    %v375 = vsub.f32 %v23, %v374
    %v376 = vand.u32 %v375, 4294901760
    %377 = vmatpush1.msra.mxu0 %v376
    %378 = vmatprep.subr.mxu0 0.0
    %v379 = vand.u32 %v24, 4294901760
    %v380 = vsub.f32 %v24, %v379
    %v381 = vand.u32 %v380, 4294901760
    %382 = vmatpush1.msra.mxu0 %v381
    %383 = vmatprep.subr.mxu0 0.0
    %384 = vmatpush1.msra.mxu0 0.0
    %385 = vmatprep.subr.mxu0 0.0
    %386 = vmatpush1.msra.mxu0 0.0
    %387 = vmatprep.subr.mxu0 0.0
    %388 = vmatpush1.msra.mxu0 0.0
    %389 = vmatprep.subr.mxu0 0.0
    %390 = vmatpush1.msra.mxu0 0.0
    %391 = vmatprep.subr.mxu0 0.0
    %392 = vmatpush1.msra.mxu0 0.0
    %393 = vmatprep.subr.mxu0 0.0
    %394 = vmatpush1.msra.mxu0 0.0
    %395 = vmatprep.subr.mxu0 0.0
    %396 = vmatpush1.msra.mxu0 0.0
    %397 = vmatprep.subr.mxu0 0.0
    %398 = vmatpush1.msra.mxu0 0.0
    %399 = vmatprep.subr.mxu0 0.0
    %400 = vmatpush1.msra.mxu0 0.0
    %401 = vmatprep.subr.mxu0 0.0
    %402 = vmatpush1.msra.mxu0 0.0
    %403 = vmatprep.subr.mxu0 0.0
    %404 = vmatpush1.msra.mxu0 0.0
    %405 = vmatprep.subr.mxu0 0.0
    %406 = vmatpush1.msra.mxu0 0.0
    %407 = vmatprep.subr.mxu0 0.0
    %408 = vmatpush1.msra.mxu0 0.0
    %409 = vmatprep.subr.mxu0 0.0
    %410 = vmatpush1.msra.mxu0 0.0
    %411 = vmatprep.subr.mxu0 0.0
    %412 = vmatpush1.msra.mxu0 0.0
    %413 = vmatprep.subr.mxu0 0.0
    %414 = vmatpush1.msra.mxu0 0.0
    %415 = vmatprep.subr.mxu0 0.0
    %416 = vmatpush1.msra.mxu0 0.0
    %417 = vmatprep.subr.mxu0 0.0
    %418 = vmatpush1.msra.mxu0 0.0
    %419 = vmatprep.subr.mxu0 0.0
    %420 = vmatpush1.msra.mxu0 0.0
    %421 = vmatprep.subr.mxu0 0.0
    %422 = vmatpush1.msra.mxu0 0.0
    %423 = vmatprep.subr.mxu0 0.0
    %424 = vmatpush1.msra.mxu0 0.0
    %425 = vmatprep.subr.mxu0 0.0
    %426 = vmatpush1.msra.mxu0 0.0
    %427 = vmatprep.subr.mxu0 0.0
    %428 = vmatpush1.msra.mxu0 0.0
    %429 = vmatprep.subr.mxu0 0.0
    %430 = vmatpush1.msra.mxu0 0.0
    %431 = vmatprep.subr.mxu0 0.0
    %432 = vmatpush1.msra.mxu0 0.0
    %433 = vmatprep.subr.mxu0 0.0
    %434 = vmatpush1.msra.mxu0 0.0
    %435 = vmatprep.subr.mxu0 0.0
    %436 = vmatpush1.msra.mxu0 0.0
    %437 = vmatprep.subr.mxu0 0.0
    %438 = vmatpush1.msra.mxu0 0.0
    %439 = vmatprep.mubr.f32.mxu0 0.0
    %v440 = vand.u32 %v34, 4294901760
    %441 = vmatmul.mubr.f32.gmra.mrb[0].mxu0 %v440
    %v442 = vpop.f32.mrb[0].mxu0
    %v443 = vadd.f32 %v360, %v442
    %v444 = vpop.f32.mrb[0].mxu0
    %445 = vdwg.mxu0
    %446 = vmatprep.subr.mxu0 0.0
    %v447 = vand.u32 %v21, 4294901760
    %448 = vmatpush1.msra.mxu0 %v447
    %449 = vmatprep.subr.mxu0 0.0
    %v450 = vand.u32 %v22, 4294901760
    %451 = vmatpush1.msra.mxu0 %v450
    %452 = vmatprep.subr.mxu0 0.0
    %v453 = vand.u32 %v23, 4294901760
    %454 = vmatpush1.msra.mxu0 %v453
    %455 = vmatprep.subr.mxu0 0.0
    %v456 = vand.u32 %v24, 4294901760
    %457 = vmatpush1.msra.mxu0 %v456
    %458 = vmatprep.subr.mxu0 0.0
    %459 = vmatpush1.msra.mxu0 0.0
    %460 = vmatprep.subr.mxu0 0.0
    %461 = vmatpush1.msra.mxu0 0.0
    %462 = vmatprep.subr.mxu0 0.0
    %463 = vmatpush1.msra.mxu0 0.0
    %464 = vmatprep.subr.mxu0 0.0
    %465 = vmatpush1.msra.mxu0 0.0
    %466 = vmatprep.subr.mxu0 0.0
    %467 = vmatpush1.msra.mxu0 0.0
    %468 = vmatprep.subr.mxu0 0.0
    %469 = vmatpush1.msra.mxu0 0.0
    %470 = vmatprep.subr.mxu0 0.0
    %471 = vmatpush1.msra.mxu0 0.0
    %472 = vmatprep.subr.mxu0 0.0
    %473 = vmatpush1.msra.mxu0 0.0
    %474 = vmatprep.subr.mxu0 0.0
    %475 = vmatpush1.msra.mxu0 0.0
    %476 = vmatprep.subr.mxu0 0.0
    %477 = vmatpush1.msra.mxu0 0.0
    %478 = vmatprep.subr.mxu0 0.0
    %479 = vmatpush1.msra.mxu0 0.0
    %480 = vmatprep.subr.mxu0 0.0
    %481 = vmatpush1.msra.mxu0 0.0
    %482 = vmatprep.subr.mxu0 0.0
    %483 = vmatpush1.msra.mxu0 0.0
    %484 = vmatprep.subr.mxu0 0.0
    %485 = vmatpush1.msra.mxu0 0.0
    %486 = vmatprep.subr.mxu0 0.0
    %487 = vmatpush1.msra.mxu0 0.0
    %488 = vmatprep.subr.mxu0 0.0
    %489 = vmatpush1.msra.mxu0 0.0
    %490 = vmatprep.subr.mxu0 0.0
    %491 = vmatpush1.msra.mxu0 0.0
    %492 = vmatprep.subr.mxu0 0.0
    %493 = vmatpush1.msra.mxu0 0.0
    %494 = vmatprep.subr.mxu0 0.0
    %495 = vmatpush1.msra.mxu0 0.0
    %496 = vmatprep.subr.mxu0 0.0
    %497 = vmatpush1.msra.mxu0 0.0
    %498 = vmatprep.subr.mxu0 0.0
    %499 = vmatpush1.msra.mxu0 0.0
    %500 = vmatprep.subr.mxu0 0.0
    %501 = vmatpush1.msra.mxu0 0.0
    %502 = vmatprep.subr.mxu0 0.0
    %503 = vmatpush1.msra.mxu0 0.0
    %504 = vmatprep.subr.mxu0 0.0
    %505 = vmatpush1.msra.mxu0 0.0
    %506 = vmatprep.subr.mxu0 0.0
    %507 = vmatpush1.msra.mxu0 0.0
    %508 = vmatprep.subr.mxu0 0.0
    %509 = vmatpush1.msra.mxu0 0.0
    %510 = vmatprep.subr.mxu0 0.0
    %511 = vmatpush1.msra.mxu0 0.0
    %512 = vmatprep.subr.mxu0 0.0
    %513 = vmatpush1.msra.mxu0 0.0
    %514 = vmatprep.mubr.f32.mxu0 0.0
    %v515 = vand.u32 %v34, 4294901760
    %516 = vmatmul.mubr.f32.gmra.mrb[0].mxu0 %v515
    %v517 = vpop.f32.mrb[0].mxu0
    %v518 = vadd.f32 %v443, %v517
    %v519 = vpop.f32.mrb[0].mxu0
    %520 = vdwg.mxu0
    %v521 = vand.u32 2147483647, %v518
    %v522 = vsub.f32 0.0, %v521
    %v523 = vmul.f32 %v522, 1.442695
    %v524 = vpow.pop %v523
    %vm525 = vcmp.ge.f32.partialorder %v518, 0.0
    %v526 = vadd.f32 %v524, 1.0
    %v527 = vrcp.pop %v526
    %v528 = vmul.f32 1.0, %v527
    %v529 = vmul.f32 %v524, %v527
    %v530 = vsel %vm525, %v528, %v529
    %v531 = vmax.f32 %v518, 0.0
    %v532 = vlog2.pop %v526
    %v533 = vmul.f32 %v532, 0.6931472
    %v534 = vadd.f32 %v531, %v533
    %v535 = vadd.f32 %v534, 1.0
    %v536 = vrcp.pop %v535
    %v537 = vmul.f32 1.0, %v536
    %v538 = vadd.f32 %v530, 1e-06
    %v539 = vlog2.pop %v538
    %v540 = vmul.f32 %v539, 0.6931472
    %v541 = vsub.f32 1.0, %v530
    %v542 = vadd.f32 %v541, 1e-06
    %v543 = vlog2.pop %v542
    %v544 = vmul.f32 %v543, 0.6931472
    %v545 = vsub.f32 %v540, %v544
    %v546 = vmul.f32 %v544, 7.0
    %v547 = vlaneseq
    %v548 = vand.u32 %v547, 127
    %v549 = vcvt.s32.f32 %v548
    %v550 = vld [vmem:[%s3] sm:$0x1]
    %552 = vset.pattern.permute.xlu0 0
    %553 = vperm.xlu0 %552, %v545
    %v554 = vpop.permute.xlu0 %553
    %v556 = vmul.f32 %v549, %v554
    %v558 = vlaneseq
    %v559 = vshrl.u32 %v558, 7
    %v560 = vsub.s32 0, %v559
    %v561 = vrot.slane %v550, %v560
    %v563 = vadd.f32 %v561, %v556
    %565 = vset.pattern.permute.xlu0 0
    %566 = vperm.xlu0 %565, %v546
    %v567 = vpop.permute.xlu0 %566
    %v569 = vadd.f32 %v563, %v567
    %571 = vset.pattern.permute.xlu0 1
    %572 = vperm.xlu0 %571, %v535
    %v573 = vpop.permute.xlu0 %572
    %v575 = vmul.f32 %v569, %v573
    %vm576 = vcmask 64512
    %577 = vst.msk [vmem:[#allocation2] sm:$0xff] %vm576, %v575
    %vm578 = vcmp.eq.s32.totalorder %v548, 0
    %580 = vset.pattern.permute.xlu0 0
    %581 = vperm.xlu0 %580, %v530
    %v582 = vpop.permute.xlu0 %581
    %585 = vset.pattern.permute.xlu0 1
    %586 = vperm.xlu0 %585, %v537
    %v587 = vpop.permute.xlu0 %586
    %v589 = vsel %vm578, %v582, %v587
    %vm590 = vcmask 15360
    %591 = vst.msk [vmem:[%s5] sm:$0xff] %vm590, %v589
    // Predicated region
    $region18: #{tpu_custom_call.1} parent=1 // pred_check
      _
    $region19: #{tpu_custom_call.1} parent=1 // pred_check_branch
      %593 = sbr.rel (0) target = $region21
    $region20: #{tpu_custom_call.1} parent=1 // pred_region
      %s595 = ssub.s32 128, 128
      %596 = vsyncadd [#allocation3], %s595
      %s598 = sshll.u32 [#allocation2], 4
      %s599 = int_to_ptr.vmem [resolvable:$true] %s598
      %601 = dma.vmem_to_hbm [thread:$0]  %s599, 128, %s4, [#allocation3]
    $region21: #{tpu_custom_call.1} parent=1 // pred_fallthru
      _
    // Predicated region
    $region22: #{tpu_custom_call.1} parent=1 // pred_check
      _
    $region23: #{tpu_custom_call.1} parent=1 // pred_check_branch
      %603 = sbr.rel (0) target = $region25
    $region24: #{tpu_custom_call.1} parent=1 // pred_region
      _
    $region25: #{tpu_custom_call.1} parent=1 // pred_fallthru
      _
    // Predicated region
    $region26: #{tpu_custom_call.1} parent=1 // pred_check
      _
    $region27: #{tpu_custom_call.1} parent=1 // pred_check_branch
      %605 = sbr.rel (0) target = $region29
    $region28: #{tpu_custom_call.1} parent=1 // pred_region
      %606 = dma.done [#allocation3], 128
    $region29: #{tpu_custom_call.1} parent=1 // pred_fallthru
      _
    // Predicated region
    $region30: #{tpu_custom_call.1} parent=1 // pred_check
      _
    $region31: #{tpu_custom_call.1} parent=1 // pred_check_branch
      %608 = sbr.rel (0) target = $region33
    $region32: #{tpu_custom_call.1} parent=1 // pred_region
      _
    $region33: #{tpu_custom_call.1} parent=1 // pred_fallthru
      _
    %609 = vsyncpa [#allocation3], 1

</llo_original>
